<compile_context>
chip_gen: v7x
topology: tpu7x:2x2x1
jax: 0.10.0
libtpu: 0.0.40
codegen_flags: <defaults>
</compile_context>

<pallas_src>
import jax
import jax.numpy as jnp
from jax.experimental import pallas as pl
from jax.experimental.pallas import tpu as pltpu


def _pos_emb_kernel(re_ref, ce_ref, out_ref):
    """One S-tile of the positional embedding.

    re_ref  : (TS, half)     -- relative embedding tile for this grid step
    ce_ref  : (C, rest)      -- full channel embedding (tiny, grid-invariant)
    out_ref : (C, TS, H)     -- output tile
    """
    C, TS, H = out_ref.shape
    half = re_ref.shape[-1]
    rest = H - half

    re = re_ref[...].astype(out_ref.dtype)   # (TS, half)  -- loaded once
    ce = ce_ref[...].astype(out_ref.dtype)   # (C, rest)

    lane_aligned = (half % 128 == 0) and (rest % 128 == 0)

    # Static loop over the (small) channel axis: per-channel slab stores,
    # no (C, TS, *) temporaries -> no vreg spill / extra VMEM traffic.
    for c in range(C):
        ce_row = jnp.broadcast_to(ce[c:c + 1, :], (TS, rest))   # (TS, rest)
        if lane_aligned:
            # Both slabs are lane-dense, unmasked vst streams.
            out_ref[c, :, 0:half] = re
            out_ref[c, :, half:H] = ce_row
        else:
            # Unaligned concat boundary: build the full row in-register and
            # issue a single full-width store per channel.
            out_ref[c, :, :] = jnp.concatenate([re, ce_row], axis=-1)


def positional_embedding(relative_embedding: jax.Array,
                         channel_embedding: jax.Array,
                         *,
                         segment_tile: int | None = None,
                         out_dtype=None) -> jax.Array:
    """Pallas equivalent of PositionalEmbedding.forward().

    relative_embedding: (num_segments, half_dim)
    channel_embedding : (num_channels, hidden_dim - half_dim)
    returns           : (num_channels, num_segments, hidden_dim)
    """
    S, half = relative_embedding.shape
    C, rest = channel_embedding.shape
    H = half + rest

    if out_dtype is None:
        out_dtype = relative_embedding.dtype
    out_itemsize = jnp.dtype(out_dtype).itemsize
    in_itemsize = jnp.dtype(relative_embedding.dtype).itemsize
    # Sublane granularity for the tiled S axis: 8 (f32), 16 (bf16), 32 (int8).
    sub = max(8, 32 // out_itemsize)

    # Conservative VMEM budget valid on all generations (v7x: 64 MiB physical,
    # v5e: 16 MiB default scoped -> we raise the scoped limit below).
    VMEM_BUDGET = 12 * 1024 * 1024

    def vmem_need(t):
        return (2 * C * t * H * out_itemsize       # double-buffered output
                + 2 * t * half * in_itemsize       # double-buffered re tile
                + 2 * C * rest * in_itemsize)      # channel embedding

    if segment_tile is None:
        # ~4 MiB output blocks: near the HBM roofline on v6e, amortizes the
        # ~0.35 us/step grid overhead when C*H is small.
        target_bytes = 4 * 1024 * 1024
        segment_tile = max(sub, target_bytes // max(1, C * H * out_itemsize))

    ts = max(sub, (int(segment_tile) // sub) * sub)   # sublane-aligned tile

    # Clamp any tile (auto or user-supplied) to the VMEM budget.
    while ts > sub and vmem_need(ts) > VMEM_BUDGET:
        ts = max(sub, ((ts // 2) // sub) * sub)

    if ts >= S:
        if S >= 2 * sub:
            # Keep >= 2 grid steps so v7x's second TensorCore gets work.
            half_s = -(-S // 2)
            ts = ((half_s + sub - 1) // sub) * sub
        else:
            ts = S   # single tiny block (full-dim exception to (8,128) rule)

    grid = (pl.cdiv(S, ts),)

    # Explicit scoped-VMEM limit with headroom (bounded by v7x physical VMEM).
    vmem_limit = int(min(60 * 1024 * 1024,
                         max(4 * 1024 * 1024, 2 * vmem_need(ts))))

    # Pure-bandwidth op: tell XLA so it can schedule neighbors around it.
    bytes_accessed = int(C * S * H * out_itemsize
                         + S * half * in_itemsize
                         + grid[0] * C * rest * in_itemsize)
    cost = pl.CostEstimate(flops=0, transcendentals=0,
                           bytes_accessed=bytes_accessed)

    return pl.pallas_call(
        _pos_emb_kernel,
        out_shape=jax.ShapeDtypeStruct((C, S, H), out_dtype),
        grid=grid,
        in_specs=[
            pl.BlockSpec((ts, half), lambda s: (s, 0)),   # relative emb tile
            pl.BlockSpec((C, rest), lambda s: (0, 0)),    # channel emb (invariant)
        ],
        out_specs=pl.BlockSpec((C, ts, H), lambda s: (0, s, 0)),
        compiler_params=pltpu.CompilerParams(
            dimension_semantics=("parallel",),
            vmem_limit_bytes=vmem_limit),
        cost_estimate=cost,
    )(relative_embedding, channel_embedding)


def _reference(relative_embedding, channel_embedding):
    S, half = relative_embedding.shape
    C, rest = channel_embedding.shape
    re_tiled = jnp.broadcast_to(relative_embedding[None, :, :], (C, S, half))
    ce_tiled = jnp.broadcast_to(channel_embedding[:, None, :], (C, S, rest))
    return jnp.concatenate([re_tiled, ce_tiled], axis=-1)


if __name__ == "__main__":
    key = jax.random.PRNGKey(0)
    k_re, k_ce = jax.random.split(key)

    # --- Small module-sized config (unaligned concat boundary ->
    #     exercises the single full-width-store path).
    num_segments, num_channels, hidden_dim = 8, 4, 32
    half_dim = hidden_dim // 2
    re1 = jax.random.normal(k_re, (num_segments, half_dim), dtype=jnp.float32)
    ce1 = jax.random.normal(k_ce, (num_channels, hidden_dim - half_dim),
                            dtype=jnp.float32)

    out1 = jax.block_until_ready(positional_embedding(re1, ce1))
    ref1 = _reference(re1, ce1)
    assert out1.shape == (num_channels, num_segments, hidden_dim), out1.shape
    assert jnp.allclose(out1, ref1), "mismatch vs reference (small config)"

    # --- Lane-aligned config (half = 128): auto tiling, multi-step grid,
    #     two lane-dense slab stores per channel.
    s2, c2, h2 = 256, 4, 256
    re2 = jax.random.normal(k_re, (s2, h2 // 2), dtype=jnp.float32)
    ce2 = jax.random.normal(k_ce, (c2, h2 - h2 // 2), dtype=jnp.float32)
    out2 = jax.block_until_ready(positional_embedding(re2, ce2))
    assert jnp.allclose(out2, _reference(re2, ce2)), "mismatch (aligned config)"

    # --- bf16 output path (halves HBM write traffic for bf16 consumers).
    out3 = jax.block_until_ready(
        positional_embedding(re2, ce2, out_dtype=jnp.bfloat16))
    ref3 = _reference(re2, ce2).astype(jnp.bfloat16)
    assert jnp.allclose(out3.astype(jnp.float32), ref3.astype(jnp.float32)), \
        "mismatch (bf16 output)"

    print("KERNEL_OK")
</pallas_src>

<mosaic_0001>
module attributes {stable_mosaic.version = 11 : i64} {
  func.func @_pos_emb_kernel(%arg0: i32, %arg1: memref<8x16xf32, #tpu.memory_space<vmem>>, %arg2: memref<4x16xf32, #tpu.memory_space<vmem>>, %arg3: memref<4x8x32xf32, #tpu.memory_space<vmem>>) attributes {dimension_semantics = [#tpu.dimension_semantics<parallel>], iteration_bounds = array<i64: 1>, scalar_prefetch = 0 : i64, scratch_operands = 0 : i64, tpu.core_type = #tpu.core_type<tc>, window_params = [{transform_indices = @transform_0, window_bounds = array<i64: 8, 16>}, {pipeline_mode = #tpu.pipeline_mode<synchronous>, transform_indices = @transform_1, window_bounds = array<i64: 4, 16>}, {transform_indices = @transform_2, window_bounds = array<i64: 4, 8, 32>}]} {
    %c0 = arith.constant 0 : index
    %c0_0 = arith.constant 0 : index
    %0 = vector.load %arg1[%c0, %c0_0] : memref<8x16xf32, #tpu.memory_space<vmem>>, vector<8x16xf32>
    %c0_1 = arith.constant 0 : index
    %c0_2 = arith.constant 0 : index
    %1 = vector.load %arg2[%c0_1, %c0_2] : memref<4x16xf32, #tpu.memory_space<vmem>>, vector<4x16xf32>
    %2 = vector.extract_strided_slice %1 {offsets = [0, 0], sizes = [1, 16], strides = [1, 1]} : vector<4x16xf32> to vector<1x16xf32>
    %3 = vector.shape_cast %2 : vector<1x16xf32> to vector<1x16xf32>
    %4 = vector.broadcast %3 : vector<1x16xf32> to vector<8x16xf32>
    %5 = tpu.concatenate %0, %4 in 1 : vector<8x16xf32>, vector<8x16xf32> -> vector<8x32xf32>
    %c0_3 = arith.constant 0 : index
    %c0_4 = arith.constant 0 : index
    %c0_5 = arith.constant 0 : index
    %6 = vector.load %arg3[%c0_3, %c0_4, %c0_5] : memref<4x8x32xf32, #tpu.memory_space<vmem>>, vector<1x8x32xf32>
    %7 = vector.shape_cast %6 : vector<1x8x32xf32> to vector<8x32xf32>
    %8 = vector.shape_cast %5 : vector<8x32xf32> to vector<1x8x32xf32>
    tpu.vector_store %arg3[%c0_3, %c0_4, %c0_5], %8 {strides = array<i32>} : memref<4x8x32xf32, #tpu.memory_space<vmem>>, vector<1x8x32xf32>,
    %9 = vector.extract_strided_slice %1 {offsets = [1, 0], sizes = [1, 16], strides = [1, 1]} : vector<4x16xf32> to vector<1x16xf32>
    %10 = vector.shape_cast %9 : vector<1x16xf32> to vector<1x16xf32>
    %11 = vector.broadcast %10 : vector<1x16xf32> to vector<8x16xf32>
    %12 = tpu.concatenate %0, %11 in 1 : vector<8x16xf32>, vector<8x16xf32> -> vector<8x32xf32>
    %c1 = arith.constant 1 : index
    %c0_6 = arith.constant 0 : index
    %c0_7 = arith.constant 0 : index
    %13 = vector.load %arg3[%c1, %c0_6, %c0_7] : memref<4x8x32xf32, #tpu.memory_space<vmem>>, vector<1x8x32xf32>
    %14 = vector.shape_cast %13 : vector<1x8x32xf32> to vector<8x32xf32>
    %15 = vector.shape_cast %12 : vector<8x32xf32> to vector<1x8x32xf32>
    tpu.vector_store %arg3[%c1, %c0_6, %c0_7], %15 {strides = array<i32>} : memref<4x8x32xf32, #tpu.memory_space<vmem>>, vector<1x8x32xf32>,
    %16 = vector.extract_strided_slice %1 {offsets = [2, 0], sizes = [1, 16], strides = [1, 1]} : vector<4x16xf32> to vector<1x16xf32>
    %17 = vector.shape_cast %16 : vector<1x16xf32> to vector<1x16xf32>
    %18 = vector.broadcast %17 : vector<1x16xf32> to vector<8x16xf32>
    %19 = tpu.concatenate %0, %18 in 1 : vector<8x16xf32>, vector<8x16xf32> -> vector<8x32xf32>
    %c2 = arith.constant 2 : index
    %c0_8 = arith.constant 0 : index
    %c0_9 = arith.constant 0 : index
    %20 = vector.load %arg3[%c2, %c0_8, %c0_9] : memref<4x8x32xf32, #tpu.memory_space<vmem>>, vector<1x8x32xf32>
    %21 = vector.shape_cast %20 : vector<1x8x32xf32> to vector<8x32xf32>
    %22 = vector.shape_cast %19 : vector<8x32xf32> to vector<1x8x32xf32>
    tpu.vector_store %arg3[%c2, %c0_8, %c0_9], %22 {strides = array<i32>} : memref<4x8x32xf32, #tpu.memory_space<vmem>>, vector<1x8x32xf32>,
    %23 = vector.extract_strided_slice %1 {offsets = [3, 0], sizes = [1, 16], strides = [1, 1]} : vector<4x16xf32> to vector<1x16xf32>
    %24 = vector.shape_cast %23 : vector<1x16xf32> to vector<1x16xf32>
    %25 = vector.broadcast %24 : vector<1x16xf32> to vector<8x16xf32>
    %26 = tpu.concatenate %0, %25 in 1 : vector<8x16xf32>, vector<8x16xf32> -> vector<8x32xf32>
    %c3 = arith.constant 3 : index
    %c0_10 = arith.constant 0 : index
    %c0_11 = arith.constant 0 : index
    %27 = vector.load %arg3[%c3, %c0_10, %c0_11] : memref<4x8x32xf32, #tpu.memory_space<vmem>>, vector<1x8x32xf32>
    %28 = vector.shape_cast %27 : vector<1x8x32xf32> to vector<8x32xf32>
    %29 = vector.shape_cast %26 : vector<8x32xf32> to vector<1x8x32xf32>
    tpu.vector_store %arg3[%c3, %c0_10, %c0_11], %29 {strides = array<i32>} : memref<4x8x32xf32, #tpu.memory_space<vmem>>, vector<1x8x32xf32>,
    return
  }
  func.func @transform_0(%arg0: i32) -> (i32, i32) {
    %c0_i32 = arith.constant 0 : i32
    %c0_i32_0 = arith.constant 0 : i32
    return %arg0, %c0_i32 : i32, i32
  }
  func.func @transform_1(%arg0: i32) -> (i32, i32) {
    %c0_i32 = arith.constant 0 : i32
    %c0_i32_0 = arith.constant 0 : i32
    %c0_i32_1 = arith.constant 0 : i32
    return %c0_i32, %c0_i32_0 : i32, i32
  }
  func.func @transform_2(%arg0: i32) -> (i32, i32, i32) {
    %c0_i32 = arith.constant 0 : i32
    %c0_i32_0 = arith.constant 0 : i32
    %c0_i32_1 = arith.constant 0 : i32
    return %c0_i32, %arg0, %c0_i32_0 : i32, i32, i32
  }
}

</mosaic_0001>

<llo_original>
// kernel: tpu_custom_call.1
$region0: #{tpu_custom_call.1}
  #allocation0 [shape = 'u32[]', space=smem, size = 0x4, offset = 0x4, fixed_abs, tag = 'smem constant byte address 0x4 - core index']
  #allocation1 [shape = 'u32[144,128]{1,0:T(1,128)}', space=vmem, size = 0x12000, scoped, tag = 'internal scratch']
  %s0 = inlined_call_operand.hbm [shape: f32[8,16], index: 0, kind: input, shape index: {}]
  %s1 = inlined_call_operand.hbm [shape: f32[4,16], index: 1, kind: input, shape index: {}]
  %s2 = inlined_call_operand.hbm [shape: f32[4,8,32], index: 2, kind: output, shape index: {}]
  %s3 = sld [smem:[#allocation0]]
  $region26: #{tpu_custom_call.1} parent=0
    _
  %s5 = ssub.s32 1, %s3
  %s6 = scalar_select 0, %s5, %s3
  $region1: #{tpu_custom_call.1} parent=0
    #allocation2 [shape = 'u8[4096]{0}', space=vmem, size = 0x1000, scoped, tag = 'input window, operand 0, single buffered']
    #allocation3 [shape = 's32[1]{0}', space=sflag, size = 0x4, scoped, tag = 'scoped memory for tpu_custom_call.1']
    #allocation4 [shape = 's32[1]{0}', space=sflag, size = 0x4, scoped, tag = 'scoped memory for tpu_custom_call.1']
    #allocation5 [shape = 'u8[2048]{0}', space=vmem, size = 0x800, scoped, tag = 'input window, operand 1, single buffered']
    #allocation6 [shape = 's32[1]{0}', space=sflag, size = 0x4, scoped, tag = 'scoped memory for tpu_custom_call.1']
    #allocation7 [shape = 'u8[16384]{0}', space=vmem, size = 0x4000, scoped, tag = 'output window, operand 0, single buffered']
    %7 = vsyncpa [#allocation3], 0
    %8 = vsyncpa [#allocation6], 0
    %9 = vsyncpa [#allocation4], 0
    // Predicated region
    $region2: #{tpu_custom_call.1} parent=1 // pred_check
      _
    $region3: #{tpu_custom_call.1} parent=1 // pred_check_branch
      %11 = sbr.rel (0) target = $region5
    $region4: #{tpu_custom_call.1} parent=1 // pred_region
      %s13 = ssub.s32 128, 128
      %14 = vsyncadd [#allocation3], %s13
      %s16 = sshll.u32 [#allocation2], 4
      %s17 = int_to_ptr.vmem [resolvable:$true] %s16
      %19 = dma.hbm_to_vmem [thread:$0]  %s0, 128, %s17, [#allocation3]
    $region5: #{tpu_custom_call.1} parent=1 // pred_fallthru
      _
    // Predicated region
    $region6: #{tpu_custom_call.1} parent=1 // pred_check
      _
    $region7: #{tpu_custom_call.1} parent=1 // pred_check_branch
      %21 = sbr.rel (0) target = $region9
    $region8: #{tpu_custom_call.1} parent=1 // pred_region
      %s23 = ssub.s32 64, 64
      %24 = vsyncadd [#allocation6], %s23
      %s26 = sshll.u32 [#allocation5], 4
      %s27 = int_to_ptr.vmem [resolvable:$true] %s26
      %29 = dma.hbm_to_vmem [thread:$0]  %s1, 64, %s27, [#allocation6]
    $region9: #{tpu_custom_call.1} parent=1 // pred_fallthru
      _
    // Predicated region
    $region10: #{tpu_custom_call.1} parent=1 // pred_check
      _
    $region11: #{tpu_custom_call.1} parent=1 // pred_check_branch
      %31 = sbr.rel (0) target = $region13
    $region12: #{tpu_custom_call.1} parent=1 // pred_region
      %32 = dma.done [#allocation3], 128
    $region13: #{tpu_custom_call.1} parent=1 // pred_fallthru
      _
    // Predicated region
    $region14: #{tpu_custom_call.1} parent=1 // pred_check
      _
    $region15: #{tpu_custom_call.1} parent=1 // pred_check_branch
      %34 = sbr.rel (0) target = $region17
    $region16: #{tpu_custom_call.1} parent=1 // pred_region
      %35 = dma.done [#allocation6], 64
    $region17: #{tpu_custom_call.1} parent=1 // pred_fallthru
      _
    %v36 = vld [vmem:[#allocation2] sm:$0xff]
    %v37 = vld [vmem:[#allocation5] sm:$0xf]
    %v38 = vlaneseq
    %v39 = vshrl.u32 %v38, 7
    %v40 = vsub.s32 0, %v39
    %v41 = vrot.slane %v37, %v40
    %43 = vrot.lane.b32.xlu0 %v41, 16
    %v44 = vpop.permute.xlu0 %43
    %vm46 = vcmask 130048
    %v47 = vsel %vm46, %v36, %v44
    %vm48 = vcmask 261120
    %49 = vst.msk [vmem:[#allocation7] sm:$0xff] %vm48, %v47
    %v50 = vlaneseq
    %v51 = vshrl.u32 %v50, 7
    %v52 = vsub.s32 1, %v51
    %v53 = vrot.slane %v37, %v52
    %55 = vrot.lane.b32.xlu0 %v53, 16
    %v56 = vpop.permute.xlu0 %55
    %v58 = vsel %vm46, %v36, %v56
    %s59 = scalar_lea.vmem [#allocation7], 8
    %60 = vst.msk [vmem:[%s59] sm:$0xff] %vm48, %v58
    %v61 = vlaneseq
    %v62 = vshrl.u32 %v61, 7
    %v63 = vsub.s32 2, %v62
    %v64 = vrot.slane %v37, %v63
    %66 = vrot.lane.b32.xlu0 %v64, 16
    %v67 = vpop.permute.xlu0 %66
    %v69 = vsel %vm46, %v36, %v67
    %s70 = scalar_lea.vmem [#allocation7], 16
    %71 = vst.msk [vmem:[%s70] sm:$0xff] %vm48, %v69
    %v72 = vlaneseq
    %v73 = vshrl.u32 %v72, 7
    %v74 = vsub.s32 3, %v73
    %v75 = vrot.slane %v37, %v74
    %77 = vrot.lane.b32.xlu0 %v75, 16
    %v78 = vpop.permute.xlu0 %77
    %v80 = vsel %vm46, %v36, %v78
    %s81 = scalar_lea.vmem [#allocation7], 24
    %82 = vst.msk [vmem:[%s81] sm:$0xff] %vm48, %v80
    // Predicated region
    $region18: #{tpu_custom_call.1} parent=1 // pred_check
      _
    $region19: #{tpu_custom_call.1} parent=1 // pred_check_branch
      %84 = sbr.rel (0) target = $region21
    $region20: #{tpu_custom_call.1} parent=1 // pred_region
      %s86 = ssub.s32 512, 512
      %87 = vsyncadd [#allocation4], %s86
      %s88 = sshll.u32 [#allocation7], 4
      %s89 = int_to_ptr.vmem [resolvable:$true] %s88
      %94 = dma.vmem_to_hbm [thread:$0]  %s89, 512, %s2, [#allocation4], 128, 128, 8
    $region21: #{tpu_custom_call.1} parent=1 // pred_fallthru
      _
    // Predicated region
    $region22: #{tpu_custom_call.1} parent=1 // pred_check
      _
    $region23: #{tpu_custom_call.1} parent=1 // pred_check_branch
      %96 = sbr.rel (0) target = $region25
    $region24: #{tpu_custom_call.1} parent=1 // pred_region
      %97 = dma.done [#allocation4], 512
    $region25: #{tpu_custom_call.1} parent=1 // pred_fallthru
      _
    %98 = vsyncpa [#allocation3], 1
    %99 = vsyncpa [#allocation6], 1
    %100 = vsyncpa [#allocation4], 1

</llo_original>
